<compile_context>
chip_gen: v7x
topology: tpu7x:2x2x1
jax: 0.10.0
libtpu: 0.0.40
codegen_flags: <defaults>
</compile_context>

<pallas_src>
import functools

import jax
import jax.numpy as jnp
from jax import lax
from jax.experimental import pallas as pl
from jax.experimental.pallas import tpu as pltpu

_MIB = 1024 * 1024


# ----------------------------------------------------------------------------
# Pallas kernel: fused (cast -> W @ X -> + folded-BN bias -> ReLU), NCHW.
#   x_ref : (1, K, TM)    f32 or bf16  (TM = lane-dense flattened-spatial tile)
#   w_ref : (Cout, K)     bf16         (BN scale already folded in)
#   b_ref : (Cout, 1)     f32
#   o_ref : (1, Cout, TM) f32 or bf16
# ----------------------------------------------------------------------------
def _conv_bn_act_kernel(x_ref, w_ref, b_ref, o_ref, *, relu):
    x = x_ref[0].astype(w_ref.dtype)          # in-kernel f32->bf16 cast (VPU, hidden under DMA)
    acc = jnp.dot(w_ref[...], x,
                  preferred_element_type=jnp.float32)        # (Cout, TM) f32
    y = acc + b_ref[...]                                     # folded-BN bias
    if relu:
        y = jnp.maximum(y, 0.0)
    o_ref[0] = y.astype(o_ref.dtype)


def _round_up(x, m):
    return pl.cdiv(x, m) * m


def _vmem_capacity_bytes():
    try:
        cap = getattr(pltpu.get_tpu_info(), "vmem_capacity_bytes", None)
        if cap:
            return int(cap)
    except Exception:
        pass
    return 64 * _MIB                 # conservative fallback (v7x per-TC VMEM)


def _vmem_limit_bytes():
    # ~96 MiB on v5e/v6e (128 MiB physical), ~48 MiB on v7x (64 MiB physical).
    cap = _vmem_capacity_bytes()
    return max(32 * _MIB, min((3 * cap) // 4, 96 * _MIB))


def _pick_spatial_tile(M, N, in_col_bytes, out_col_bytes, fixed_bytes):
    """Largest lane-dense spatial tile whose double-buffered working set stays
    comfortably inside this generation's scoped VMEM.  Keeps >=2 parallel grid
    blocks when N == 1 so both v7x TensorCores stay busy."""
    if M < 128:
        return M                                     # one full-extent block
    budget = (3 * _vmem_limit_bytes()) // 5          # headroom for compiler scratch
    cap = M
    if N == 1 and M >= 256:
        cap = _round_up(pl.cdiv(M, 2), 128)          # >=2 blocks along the M axis
    for cand in (32768, 16384, 8192, 4096, 2048, 1024, 512, 256, 128):
        step = 2 * cand * (in_col_bytes + out_col_bytes) + fixed_bytes
        if cand <= cap and step <= budget:
            return cand
    return 128


def fused_conv_bn_act(x3d, w, bias, *, relu, out_dtype=jnp.float32):
    """out[n] = act(w @ bf16(x3d[n]) + bias).

    x3d : (N, K, M) f32 or bf16  (M = flattened spatial positions)
    w   : (Cout, K) bf16         (BN scale folded)
    bias: (Cout, 1) f32
    returns (N, Cout, M) in out_dtype.
    """
    N, K, M = x3d.shape
    Cout = w.shape[0]

    in_col = K * jnp.dtype(x3d.dtype).itemsize
    out_col = Cout * jnp.dtype(out_dtype).itemsize
    fixed = Cout * K * jnp.dtype(w.dtype).itemsize + Cout * 4
    tm = _pick_spatial_tile(M, N, in_col, out_col, fixed)

    kernel = functools.partial(_conv_bn_act_kernel, relu=relu)
    # No wrapper-side pad / slice: grid uses cdiv and Pallas masks the ragged
    # tail writeback (columns are independent so OOB garbage never leaks).
    # TODO(synk): if xprof shows exposed input DMA at large tm, add
    # pipeline_mode=pl.Buffered(3) to the x BlockSpec only.
    return pl.pallas_call(
        kernel,
        out_shape=jax.ShapeDtypeStruct((N, Cout, M), out_dtype),
        grid_spec=pltpu.PrefetchScalarGridSpec(
            num_scalar_prefetch=0,
            grid=(N, pl.cdiv(M, tm)),
            in_specs=[
                pl.BlockSpec((1, K, tm), lambda n, m: (n, 0, m)),
                pl.BlockSpec((Cout, K), lambda n, m: (0, 0)),
                pl.BlockSpec((Cout, 1), lambda n, m: (0, 0)),
            ],
            out_specs=pl.BlockSpec((1, Cout, tm), lambda n, m: (n, 0, m)),
        ),
        compiler_params=pltpu.CompilerParams(
            dimension_semantics=("parallel", "parallel"),
            vmem_limit_bytes=_vmem_limit_bytes(),
        ),
    )(x3d, w, bias)


# ----------------------------------------------------------------------------
# Bilinear 2x upsample (align_corners=False) via static-slice lerps (no gather).
# XLA fuses each axis pass into one loop fusion; ReLU + cast fuse into the last.
# ----------------------------------------------------------------------------
def _up2_axis(y, axis):
    n = y.shape[axis]
    prev = jnp.concatenate(
        [lax.slice_in_dim(y, 0, 1, axis=axis),
         lax.slice_in_dim(y, 0, n - 1, axis=axis)], axis=axis)   # y[i-1], clamped
    nxt = jnp.concatenate(
        [lax.slice_in_dim(y, 1, n, axis=axis),
         lax.slice_in_dim(y, n - 1, n, axis=axis)], axis=axis)   # y[i+1], clamped
    even = 0.25 * prev + 0.75 * y        # output index 2i
    odd = 0.75 * y + 0.25 * nxt          # output index 2i+1
    out = jnp.stack([even, odd], axis=axis + 1)
    return out.reshape(y.shape[:axis] + (2 * n,) + y.shape[axis + 1:])


def _bilinear_up2_nchw(y):
    """(N, C, H, W) -> (N, C, 2H, 2W); matches F.interpolate(scale_factor=2,
    mode='bilinear', align_corners=False)."""
    return _up2_axis(_up2_axis(y, 2), 3)


# ----------------------------------------------------------------------------
# Scaler module (deterministic synthetic parameters, eval-mode BN folded)
# ----------------------------------------------------------------------------
class ScalerPallas:
    def __init__(self, scale, inp, C, relu=True, key=None):
        assert scale in (-1, 0, 1)
        self.scale, self.inp, self.C, self.relu = scale, inp, C, relu
        key = jax.random.PRNGKey(42) if key is None else key
        kw, kg, kb, km, kv = jax.random.split(key, 5)

        kdim = 9 * inp if scale == -1 else inp       # K, ordered (kh, kw, cin)
        w = 0.1 * jax.random.normal(kw, (C, kdim), jnp.float32)

        gamma = 1.0 + 0.1 * jax.random.normal(kg, (C,), jnp.float32)
        beta = 0.1 * jax.random.normal(kb, (C,), jnp.float32)
        mean = 0.05 * jax.random.normal(km, (C,), jnp.float32)
        var = 1.0 + 0.1 * jax.random.uniform(kv, (C,), jnp.float32)
        eps = 1e-5
        s = gamma / jnp.sqrt(var + eps)

        # Fold the eval-mode BN scale into the conv weight; keep only the bias.
        self.w = (w * s[:, None]).astype(jnp.bfloat16)           # (Cout, K) bf16
        self.bias = (beta - mean * s).reshape(C, 1)              # (Cout, 1) f32

    def __call__(self, x_nchw):
        N, Cin, H, W = x_nchw.shape

        if self.scale == 0:                                      # 1x1 conv
            # f32 input goes straight to the kernel; cast happens in-kernel.
            y = fused_conv_bn_act(x_nchw.reshape(N, Cin, H * W),
                                  self.w, self.bias, relu=self.relu)
            return y.reshape(N, self.C, H, W)

        if self.scale == 1:                                      # up2 -> 1x1 conv
            # conv1x1+BN (per-channel linear) commutes exactly with the
            # channel-wise bilinear upsample: run the matmul at the original
            # resolution, emit a bf16 intermediate (half HBM traffic), then
            # upsample the small Cout-channel result in f32; ReLU last.
            y = fused_conv_bn_act(x_nchw.reshape(N, Cin, H * W),
                                  self.w, self.bias, relu=False,
                                  out_dtype=jnp.bfloat16)
            y = y.reshape(N, self.C, H, W).astype(jnp.float32)
            y = _bilinear_up2_nchw(y)
            if self.relu:
                y = jnp.maximum(y, 0.0)
            return y

        # scale == -1: 3x3 / stride-2 / pad-1 conv as a K = 9*Cin matmul.
        x = x_nchw.astype(jnp.bfloat16)                          # bf16 im2col (half bytes)
        Ho, Wo = (H + 1) // 2, (W + 1) // 2
        xp = jnp.pad(x, ((0, 0), (0, 0), (1, 1), (1, 1)))
        taps = [xp[:, :, kh:kh + 2 * Ho - 1:2, kw:kw + 2 * Wo - 1:2]
                for kh in range(3) for kw in range(3)]
        cols = jnp.concatenate(taps, axis=1).reshape(N, 9 * Cin, Ho * Wo)
        y = fused_conv_bn_act(cols, self.w, self.bias, relu=self.relu)
        return y.reshape(N, self.C, Ho, Wo)


# ----------------------------------------------------------------------------
# Pure-JAX f32 reference (for a tolerance self-check in __main__)
# ----------------------------------------------------------------------------
def _ref_bilinear_up2(x):
    def idx(n):
        o = jnp.arange(2 * n, dtype=jnp.float32)
        c = jnp.maximum((o + 0.5) * 0.5 - 0.5, 0.0)
        i0 = jnp.minimum(jnp.floor(c).astype(jnp.int32), n - 1)
        i1 = jnp.minimum(i0 + 1, n - 1)
        return i0, i1, c - i0.astype(jnp.float32)
    _, _, H, W = x.shape
    i0, i1, f = idx(H)
    x = (x[:, :, i0, :] * (1.0 - f)[None, None, :, None]
         + x[:, :, i1, :] * f[None, None, :, None])
    j0, j1, g = idx(W)
    x = (x[:, :, :, j0] * (1.0 - g)[None, None, None, :]
         + x[:, :, :, j1] * g[None, None, None, :])
    return x


def _ref_forward(m, x):
    w = m.w.astype(jnp.float32)
    b = m.bias.reshape(1, m.C, 1, 1)
    if m.scale == 0:
        y = jnp.einsum('ok,nkhw->nohw', w, x) + b
    elif m.scale == 1:
        y = jnp.einsum('ok,nkhw->nohw', w, _ref_bilinear_up2(x)) + b
    else:
        w4 = w.reshape(m.C, 3, 3, m.inp).transpose(0, 3, 1, 2)   # OIHW
        y = lax.conv_general_dilated(
            x, w4, window_strides=(2, 2), padding=((1, 1), (1, 1)),
            dimension_numbers=('NCHW', 'OIHW', 'NCHW')) + b
    return jnp.maximum(y, 0.0) if m.relu else y


# ----------------------------------------------------------------------------
if __name__ == "__main__":
    key = jax.random.PRNGKey(0)
    kx, kp = jax.random.split(key)

    N, inp, C, H, W = 2, 4, 8, 16, 16
    x = jax.random.normal(kx, (N, inp, H, W), jnp.float32)       # NCHW input
    # Reference uses the same bf16-rounded activations so the comparison only
    # measures kernel correctness (bf16 products are exact, accum in f32).
    xr = x.astype(jnp.bfloat16).astype(jnp.float32)

    expected = {0: (N, C, H, W), 1: (N, C, 2 * H, 2 * W), -1: (N, C, H // 2, W // 2)}
    for scale in (0, 1, -1):
        m = ScalerPallas(scale, inp, C, relu=True, key=kp)
        y = jax.jit(m.__call__)(x)
        jax.block_until_ready(y)
        assert y.shape == expected[scale], (scale, y.shape)
        ref = _ref_forward(m, xr)
        err = float(jnp.max(jnp.abs(y.astype(jnp.float32) - ref)))
        assert err < 1e-2, f"scale={scale}: max abs err {err}"

    print("KERNEL_OK")
</pallas_src>

<mosaic_0001>
module attributes {stable_mosaic.version = 11 : i64} {
  func.func @_conv_bn_act_kernel(%arg0: i32, %arg1: i32, %arg2: memref<1x4x256xf32, #tpu.memory_space<vmem>>, %arg3: memref<8x4xbf16, #tpu.memory_space<vmem>>, %arg4: memref<8x1xf32, #tpu.memory_space<vmem>>, %arg5: memref<1x8x256xf32, #tpu.memory_space<vmem>>) attributes {dimension_semantics = [#tpu.dimension_semantics<parallel>, #tpu.dimension_semantics<parallel>], iteration_bounds = array<i64: 2, 1>, scalar_prefetch = 0 : i64, scratch_operands = 0 : i64, tpu.core_type = #tpu.core_type<tc>, window_params = [{transform_indices = @transform_0, window_bounds = array<i64: 1, 4, 256>}, {pipeline_mode = #tpu.pipeline_mode<synchronous>, transform_indices = @transform_1, window_bounds = array<i64: 8, 4>}, {pipeline_mode = #tpu.pipeline_mode<synchronous>, transform_indices = @transform_2, window_bounds = array<i64: 8, 1>}, {transform_indices = @transform_3, window_bounds = array<i64: 1, 8, 256>}]} {
    %c0 = arith.constant 0 : index
    %c0_0 = arith.constant 0 : index
    %c0_1 = arith.constant 0 : index
    %0 = vector.load %arg2[%c0, %c0_0, %c0_1] : memref<1x4x256xf32, #tpu.memory_space<vmem>>, vector<1x4x256xf32>
    %1 = vector.shape_cast %0 : vector<1x4x256xf32> to vector<4x256xf32>
    %2 = arith.truncf %1 : vector<4x256xf32> to vector<4x256xbf16>
    %c0_2 = arith.constant 0 : index
    %c0_3 = arith.constant 0 : index
    %3 = vector.load %arg3[%c0_2, %c0_3] : memref<8x4xbf16, #tpu.memory_space<vmem>>, vector<8x4xbf16>
    %cst = arith.constant dense<0.000000e+00> : vector<8x256xf32>
    %4 = tpu.matmul %3, %2, %cst {dimension_numbers = #tpu.dot_dimension_numbers<[1], [0], [0], [1], [0, 0, 1, 1], [], []>} : vector<8x4xbf16>, vector<4x256xbf16>, vector<8x256xf32> -> vector<8x256xf32>
    %c0_4 = arith.constant 0 : index
    %c0_5 = arith.constant 0 : index
    %5 = vector.load %arg4[%c0_4, %c0_5] : memref<8x1xf32, #tpu.memory_space<vmem>>, vector<8x1xf32>
    %6 = vector.broadcast %5 : vector<8x1xf32> to vector<8x256xf32>
    %7 = arith.addf %4, %6 : vector<8x256xf32>
    %cst_6 = arith.constant 0.000000e+00 : f32
    %8 = vector.broadcast %cst_6 : f32 to vector<8x256xf32>
    %9 = arith.maximumf %7, %8 : vector<8x256xf32>
    %c0_7 = arith.constant 0 : index
    %c0_8 = arith.constant 0 : index
    %c0_9 = arith.constant 0 : index
    %10 = vector.load %arg5[%c0_7, %c0_8, %c0_9] : memref<1x8x256xf32, #tpu.memory_space<vmem>>, vector<1x8x256xf32>
    %11 = vector.shape_cast %10 : vector<1x8x256xf32> to vector<8x256xf32>
    %12 = vector.shape_cast %9 : vector<8x256xf32> to vector<1x8x256xf32>
    tpu.vector_store %arg5[%c0_7, %c0_8, %c0_9], %12 {strides = array<i32>} : memref<1x8x256xf32, #tpu.memory_space<vmem>>, vector<1x8x256xf32>,
    return
  }
  func.func @transform_0(%arg0: i32, %arg1: i32) -> (i32, i32, i32) {
    %c0_i32 = arith.constant 0 : i32
    %c0_i32_0 = arith.constant 0 : i32
    return %arg0, %c0_i32, %arg1 : i32, i32, i32
  }
  func.func @transform_1(%arg0: i32, %arg1: i32) -> (i32, i32) {
    %c0_i32 = arith.constant 0 : i32
    %c0_i32_0 = arith.constant 0 : i32
    %c0_i32_1 = arith.constant 0 : i32
    return %c0_i32, %c0_i32_0 : i32, i32
  }
  func.func @transform_2(%arg0: i32, %arg1: i32) -> (i32, i32) {
    %c0_i32 = arith.constant 0 : i32
    %c0_i32_0 = arith.constant 0 : i32
    %c0_i32_1 = arith.constant 0 : i32
    return %c0_i32, %c0_i32_0 : i32, i32
  }
  func.func @transform_3(%arg0: i32, %arg1: i32) -> (i32, i32, i32) {
    %c0_i32 = arith.constant 0 : i32
    %c0_i32_0 = arith.constant 0 : i32
    return %arg0, %c0_i32, %arg1 : i32, i32, i32
  }
}

</mosaic_0001>

<llo_original>
// kernel: a_call__.1
$region0: #{a_call__.1}
  #allocation0 [shape = 'u32[]', space=smem, size = 0x4, offset = 0x4, fixed_abs, tag = 'smem constant byte address 0x4 - core index']
  #allocation1 [shape = 'u32[144,128]{1,0:T(1,128)}', space=vmem, size = 0x12000, scoped, tag = 'internal scratch']
  %s0 = inlined_call_operand.vmem [shape: f32[2,4,256], index: 0, kind: input, shape index: {}]
  %s1 = inlined_call_operand.vmem [shape: bf16[8,4], index: 1, kind: input, shape index: {}]
  %s2 = inlined_call_operand.vmem [shape: f32[8,1], index: 2, kind: input, shape index: {}]
  %s3 = inlined_call_operand.vmem [shape: f32[2,8,256], index: 3, kind: output, shape index: {}]
  %s4 = sld [smem:[#allocation0]]
  $region45: #{a_call__.1} parent=0
    _
  %s6 = ssub.s32 1, %s4
  %s7 = scalar_select 0, %s6, %s4
  loop: start=0, step=1, limit=4
  $region2: #{a_call__.1} parent=0 // loop_pre_header
    _
  $region3: #{a_call__.1} parent=0 // loop_header
    %s9 = sphi 0, %s13
    %p10 = scmp.ge.s32.totalorder %s9, 4
    %s16 = sphi 0, %s28
    %s17 = sphi 0, %s24
    %s18 = sphi 0, %s16
    %s19 = sphi 0, %s17
    %s20 = sphi 0, %s18
    %s21 = sphi 0, %s19
    %s33 = sphi 0, %s35
    %s36 = sphi 0, %s33
    %s37 = sphi 0, %s36
    %s53 = sphi 0, %s37
    %s57 = sphi 0, %s57
    %s59 = sphi 0, %s57
    %s60 = sphi 0, %s59
    %s74 = sphi 0, %s60
    %s78 = sphi 0, %s78
    %s80 = sphi 0, %s78
    %s81 = sphi 0, %s80
    %s95 = sphi 0, %s81
    %s103 = sphi 0, %s105
    %s106 = sphi 0, %s103
    %s107 = sphi 0, %s106
    %s123 = sphi 0, %s107
  $region4: #{a_call__.1} parent=0 // loop_header_branch
    %12 = sbr.rel (%p10) target = $region8
  $region5: #{a_call__.1} parent=0 // loop_body
    %s14 = ssub.s32 %s9, 1
    %s15 = ssub.s32 %s9, 2
    %s22 = sadd.s32 1, %s17
    %p23 = scmp.ge.s32.totalorder %s22, 1
    %s24 = scalar_select %p23, 0, %s22
    %s25 = sadd.s32 1, %s16
    %s26 = scalar_select %p23, %s25, %s16
    %p27 = scmp.ge.s32.totalorder %s26, 2
    %s28 = scalar_select %p27, 0, %s26
    %s29 = ssub.s32 %s16, %s28
    %s30 = ssub.s32 %s17, %s24
    %s31 = sor.u32 %s29, %s30
    %p32 = scmp.eq.s32.totalorder %s31, 0
    %s34 = sadd.s32 %s33, 1
    %s35 = scalar_select %p32, %s33, %s34
    %p38 = pneg %p32
    %p39 = scmp.eq.s32.totalorder %s9, 1
    %p40 = por %p38, %p39
    %p41 = scmp.ne.s32.totalorder %s33, %s36
    %p42 = scmp.eq.s32.totalorder %s9, 0
    %p43 = por %p41, %p42
    %p44 = scmp.ne.s32.totalorder %s33, %s36
    %p45 = scmp.eq.s32.totalorder %s14, 1
    %p46 = por %p44, %p45
    %p47 = scmp.ne.s32.totalorder %s36, %s37
    %p48 = scmp.eq.s32.totalorder %s14, 0
    %p49 = por %p47, %p48
    %p50 = scmp.ne.s32.totalorder %s36, %s37
    %p51 = scmp.eq.s32.totalorder %s15, 1
    %p52 = por %p50, %p51
    %p54 = scmp.ne.s32.totalorder %s37, %s53
    %p55 = scmp.eq.s32.totalorder %s15, 0
    %p56 = por %p54, %p55
    %s58 = sadd.s32 %s57, 1
    %p61 = scmp.eq.s32.totalorder %s9, 1
    %p62 = scmp.ne.s32.totalorder %s57, %s59
    %p63 = scmp.eq.s32.totalorder %s9, 0
    %p64 = por %p62, %p63
    %p65 = scmp.ne.s32.totalorder %s57, %s59
    %p66 = scmp.eq.s32.totalorder %s14, 1
    %p67 = por %p65, %p66
    %p68 = scmp.ne.s32.totalorder %s59, %s60
    %p69 = scmp.eq.s32.totalorder %s14, 0
    %p70 = por %p68, %p69
    %p71 = scmp.ne.s32.totalorder %s59, %s60
    %p72 = scmp.eq.s32.totalorder %s15, 1
    %p73 = por %p71, %p72
    %p75 = scmp.ne.s32.totalorder %s60, %s74
    %p76 = scmp.eq.s32.totalorder %s15, 0
    %p77 = por %p75, %p76
    %s79 = sadd.s32 %s78, 1
    %p82 = scmp.eq.s32.totalorder %s9, 1
    %p83 = scmp.ne.s32.totalorder %s78, %s80
    %p84 = scmp.eq.s32.totalorder %s9, 0
    %p85 = por %p83, %p84
    %p86 = scmp.ne.s32.totalorder %s78, %s80
    %p87 = scmp.eq.s32.totalorder %s14, 1
    %p88 = por %p86, %p87
    %p89 = scmp.ne.s32.totalorder %s80, %s81
    %p90 = scmp.eq.s32.totalorder %s14, 0
    %p91 = por %p89, %p90
    %p92 = scmp.ne.s32.totalorder %s80, %s81
    %p93 = scmp.eq.s32.totalorder %s15, 1
    %p94 = por %p92, %p93
    %p96 = scmp.ne.s32.totalorder %s81, %s95
    %p97 = scmp.eq.s32.totalorder %s15, 0
    %p98 = por %p96, %p97
    %s99 = ssub.s32 %s16, %s28
    %s100 = ssub.s32 %s17, %s24
    %s101 = sor.u32 %s99, %s100
    %p102 = scmp.eq.s32.totalorder %s101, 0
    %s104 = sadd.s32 %s103, 1
    %s105 = scalar_select %p102, %s103, %s104
    %p108 = pneg %p102
    %p109 = scmp.eq.s32.totalorder %s9, 1
    %p110 = por %p108, %p109
    %p111 = scmp.ne.s32.totalorder %s103, %s106
    %p112 = scmp.eq.s32.totalorder %s9, 0
    %p113 = por %p111, %p112
    %p114 = scmp.ne.s32.totalorder %s103, %s106
    %p115 = scmp.eq.s32.totalorder %s14, 1
    %p116 = por %p114, %p115
    %p117 = scmp.ne.s32.totalorder %s106, %s107
    %p118 = scmp.eq.s32.totalorder %s14, 0
    %p119 = por %p117, %p118
    %p120 = scmp.ne.s32.totalorder %s106, %s107
    %p121 = scmp.eq.s32.totalorder %s15, 1
    %p122 = por %p120, %p121
    %p124 = scmp.ne.s32.totalorder %s107, %s123
    %p125 = scmp.eq.s32.totalorder %s15, 0
    %p126 = por %p124, %p125
    %p127 = scmp.le.s32.totalorder 1, %s9
    %p128 = scmp.lt.s32.totalorder %s9, 3
    %p129 = pnand %p127, %p128
    %p130 = pneg %p129
    // Predicated region
    $region9: #{a_call__.1} parent=5 // pred_check
      _
    $region10: #{a_call__.1} parent=5 // pred_check_branch
      %132 = sbr.rel (%p129) target = $region12
    $region11: #{a_call__.1} parent=5 // pred_region
      %s133 = ssub.s32 %s9, 1
      // Predicated region
      $region13: #{a_call__.1} parent=11 // pred_check
        %p134 = pneg %p70
      $region14: #{a_call__.1} parent=11 // pred_check_branch
        %136 = sbr.rel (%p134) target = $region16
      $region15: #{a_call__.1} parent=11 // pred_region
        _
      $region16: #{a_call__.1} parent=11 // pred_fallthru
        _
      // Predicated region
      $region17: #{a_call__.1} parent=11 // pred_check
        %p137 = pneg %p91
      $region18: #{a_call__.1} parent=11 // pred_check_branch
        %139 = sbr.rel (%p137) target = $region20
      $region19: #{a_call__.1} parent=11 // pred_region
        _
      $region20: #{a_call__.1} parent=11 // pred_fallthru
        _
    $region12: #{a_call__.1} parent=5 // pred_fallthru
      _
    %p140 = scmp.lt.s32.totalorder %s9, 2
    // Predicated region
    $region21: #{a_call__.1} parent=5 // pred_check
      %p141 = pneg %p140
    $region22: #{a_call__.1} parent=5 // pred_check_branch
      %143 = sbr.rel (%p141) target = $region24
    $region23: #{a_call__.1} parent=5 // pred_region
      // Predicated region
      $region25: #{a_call__.1} parent=23 // pred_check
        %p144 = pneg %p43
      $region26: #{a_call__.1} parent=23 // pred_check_branch
        %146 = sbr.rel (%p144) target = $region28
      $region27: #{a_call__.1} parent=23 // pred_region
        %s147 = smul.u32 2, %s17
        %p148 = scmp.lt.s32.totalorder %s16, 1
        %s149 = scalar_select %p148, %s16, 1
        %p150 = scmp.lt.s32.totalorder %s147, 1
        %s151 = scalar_select %p150, %s147, 1
        %s152 = smul.addr %s149, 2
        %s153 = sadd.s32 %s151, %s152
        %s154 = smul.addr %s153, 4
        %s155 = scalar_lea.vmem %s0, %s154
        %s156 = smul.u32 2, %s17
      $region28: #{a_call__.1} parent=23 // pred_fallthru
        _
    $region24: #{a_call__.1} parent=5 // pred_fallthru
      _
    %p157 = scmp.le.s32.totalorder 1, %s9
    %p158 = scmp.lt.s32.totalorder %s9, 3
    %p159 = pnand %p157, %p158
    %p160 = pneg %p159
    // Predicated region
    $region29: #{a_call__.1} parent=5 // pred_check
      _
    $region30: #{a_call__.1} parent=5 // pred_check_branch
      %162 = sbr.rel (%p159) target = $region32
    $region31: #{a_call__.1} parent=5 // pred_region
      %s163 = ssub.s32 %s9, 1
      %s164 = smul.u32 2, %s19
      %p165 = scmp.lt.s32.totalorder %s18, 1
      %s166 = scalar_select %p165, %s18, 1
      %p167 = scmp.lt.s32.totalorder %s164, 1
      %s168 = scalar_select %p167, %s164, 1
      %s169 = smul.addr %s166, 2
      %s170 = sadd.s32 %s168, %s169
      %s171 = smul.addr %s170, 4
      %s172 = scalar_lea.vmem %s0, %s171
      %p173 = pneg %p49
      %p174 = pneg %p46
      %p175 = pneg %p70
      %p176 = pneg %p67
      %p177 = pneg %p91
      %p178 = pneg %p88
      %p179 = pneg %p119
      %p180 = pneg %p116
      %s181 = smul.u32 2, %s19
      %p182 = scmp.lt.s32.totalorder %s18, 1
      %s183 = scalar_select %p182, %s18, 1
      %p184 = scmp.lt.s32.totalorder %s181, 1
      %s185 = scalar_select %p184, %s181, 1
      %s186 = smul.addr %s183, 2
      %s187 = sadd.s32 %s185, %s186
      %s188 = smul.addr %s187, 8
      %s189 = scalar_lea.vmem %s3, %s188
      %s190 = smul.u32 2, %s19
      %p191 = scmp.lt.s32.totalorder %s18, 1
      %s192 = scalar_select %p191, %s18, 1
      %p193 = scmp.lt.s32.totalorder %s190, 1
      %s194 = scalar_select %p193, %s190, 1
      %s195 = smul.addr %s192, 2
      %s196 = sadd.s32 %s194, %s195
      %s197 = smul.addr %s196, 4
      %s198 = scalar_lea.vmem %s0, %s197
      %s199 = smul.u32 2, %s19
      %s200 = smul.u32 2, %s19
      %p201 = scmp.lt.s32.totalorder %s18, 1
      %s202 = scalar_select %p201, %s18, 1
      %p203 = scmp.lt.s32.totalorder %s200, 1
      %s204 = scalar_select %p203, %s200, 1
      %s205 = smul.addr %s202, 2
      %s206 = sadd.s32 %s204, %s205
      %s207 = smul.addr %s206, 8
      %s208 = scalar_lea.vmem %s3, %s207
      %s209 = smul.u32 2, %s19
      %v211 = vld [vmem:[%s198] sm:$0xff]
      %v213 = vcombine.high %v211, %v211
      %v215 = vpack.c.bf16 %v211, %v211
      %v216 = vpack.c.bf16 %v213, %v213
      %v217 = vld [vmem:[%s1] sm:$0xf]
      %v218 = vld [vmem:[%s2] sm:$0xff]
      %220 = vset.pattern.permute.xlu0 0
      %221 = vperm.xlu0 %220, %v218
      %v222 = vpop.permute.xlu0 %221
      %vm224 = vcmask 31744
      %v226 = vsel %vm224, %v217, 0
      %vm228 = vcmask 1041408
      %v230 = vsel %vm228, %v215, 0
      %v233 = vsel %vm228, %v216, 0
      %235 = vmatprep.subr.bf16.mxu0 %v233
      %236 = vmatpush1.bf16.msra.mxu0 %v230
      %237 = vmatprep.subr.bf16.mxu0 0
      %238 = vmatpush1.bf16.msra.mxu0 0
      %239 = vmatprep.subr.bf16.mxu0 0
      %240 = vmatpush1.bf16.msra.mxu0 0
      %241 = vmatprep.subr.bf16.mxu0 0
      %242 = vmatpush1.bf16.msra.mxu0 0
      %243 = vmatprep.subr.bf16.mxu0 0
      %244 = vmatpush1.bf16.msra.mxu0 0
      %245 = vmatprep.subr.bf16.mxu0 0
      %246 = vmatpush1.bf16.msra.mxu0 0
      %247 = vmatprep.subr.bf16.mxu0 0
      %248 = vmatpush1.bf16.msra.mxu0 0
      %249 = vmatprep.subr.bf16.mxu0 0
      %250 = vmatpush1.bf16.msra.mxu0 0
      %251 = vmatprep.subr.bf16.mxu0 0
      %252 = vmatpush1.bf16.msra.mxu0 0
      %253 = vmatprep.subr.bf16.mxu0 0
      %254 = vmatpush1.bf16.msra.mxu0 0
      %255 = vmatprep.subr.bf16.mxu0 0
      %256 = vmatpush1.bf16.msra.mxu0 0
      %257 = vmatprep.subr.bf16.mxu0 0
      %258 = vmatpush1.bf16.msra.mxu0 0
      %259 = vmatprep.subr.bf16.mxu0 0
      %260 = vmatpush1.bf16.msra.mxu0 0
      %261 = vmatprep.subr.bf16.mxu0 0
      %262 = vmatpush1.bf16.msra.mxu0 0
      %263 = vmatprep.subr.bf16.mxu0 0
      %264 = vmatpush1.bf16.msra.mxu0 0
      %265 = vmatprep.subr.bf16.mxu0 0
      %266 = vmatpush1.bf16.msra.mxu0 0
      %267 = vmatprep.mubr.bf16.mxu0 0
      %268 = vmatmul.mubr.bf16.gmra.mrb[0].mxu0 %v226
      %v269 = vpop.f32.mrb[0].mxu0
      %v270 = vadd.f32 %v222, %v269
      %v271 = vpop.f32.mrb[0].mxu0
      %v272 = vadd.f32 %v222, %v271
      %v273 = vpop.f32.mrb[0].mxu0
      %v274 = vpop.f32.mrb[0].mxu0
      %275 = vdwg.mxu0
      %v276 = vmax.f32 %v270, 0.0
      %v277 = vmax.f32 %v272, 0.0
      %278 = vst [vmem:[%s208] sm:$0xff] %v276
      %279 = vst [vmem:[%s208 + $0x8] sm:$0xff] %v277
      %s280 = smul.u32 2, %s19
      %p281 = scmp.lt.s32.totalorder %s18, 1
      %s282 = scalar_select %p281, %s18, 1
      %p283 = scmp.lt.s32.totalorder %s280, 1
      %s284 = scalar_select %p283, %s280, 1
      %s285 = smul.addr %s282, 2
      %s286 = sadd.s32 %s284, %s285
      %s287 = smul.addr %s286, 8
      %s288 = scalar_lea.vmem %s3, %s287
      // Predicated region
      $region33: #{a_call__.1} parent=31 // pred_check
        %p289 = pneg %p116
      $region34: #{a_call__.1} parent=31 // pred_check_branch
        %291 = sbr.rel (%p289) target = $region36
      $region35: #{a_call__.1} parent=31 // pred_region
        %s292 = smul.u32 2, %s19
      $region36: #{a_call__.1} parent=31 // pred_fallthru
        _
    $region32: #{a_call__.1} parent=5 // pred_fallthru
      _
    %p293 = scmp.le.s32.totalorder 2, %s9
    // Predicated region
    $region37: #{a_call__.1} parent=5 // pred_check
      %p294 = pneg %p293
    $region38: #{a_call__.1} parent=5 // pred_check_branch
      %296 = sbr.rel (%p294) target = $region40
    $region39: #{a_call__.1} parent=5 // pred_region
      %s297 = ssub.s32 %s9, 2
      // Predicated region
      $region41: #{a_call__.1} parent=39 // pred_check
        %p298 = pneg %p122
      $region42: #{a_call__.1} parent=39 // pred_check_branch
        %300 = sbr.rel (%p298) target = $region44
      $region43: #{a_call__.1} parent=39 // pred_region
        %s301 = smul.u32 2, %s21
        %p302 = scmp.lt.s32.totalorder %s20, 1
        %s303 = scalar_select %p302, %s20, 1
        %p304 = scmp.lt.s32.totalorder %s301, 1
        %s305 = scalar_select %p304, %s301, 1
        %s306 = smul.addr %s303, 2
        %s307 = sadd.s32 %s305, %s306
        %s308 = smul.addr %s307, 8
        %s309 = scalar_lea.vmem %s3, %s308
      $region44: #{a_call__.1} parent=39 // pred_fallthru
        _
    $region40: #{a_call__.1} parent=5 // pred_fallthru
      _
  $region6: #{a_call__.1} parent=0 // loop_footer
    %s13 = sadd.s32 1, %s9
  $region7: #{a_call__.1} parent=0 // loop_footer_branch
    %8 = sbr.rel target = $region3
  $region8: #{a_call__.1} parent=0 // loop_exit
    _

</llo_original>
